<compile_context>
chip_gen: v7x
topology: tpu7x:2x2x1
jax: 0.10.0
libtpu: 0.0.40
codegen_flags: <defaults>
</compile_context>

<pallas_src>
import functools

import jax
import jax.numpy as jnp
from jax.experimental import pallas as pl
from jax.experimental.pallas import tpu as pltpu

EPS = 1e-6  # torch.nn.functional.pairwise_distance default eps


def _contrastive_loss_kernel(f1_ref, f2_ref, label_ref, o_ref, acc_ref,
                             *, margin, total_rows, tiles_per_partial,
                             needs_mask):
    """One (tile_b, D) batch tile of the contrastive loss.

    Grid = (num_partials ["parallel"], tiles_per_partial ["arbitrary"]).
    f1_ref, f2_ref : (tile_b, D) VMEM tiles
    label_ref      : (tile_b, 1) VMEM tile
    o_ref          : (8, 128)   per-partial output tile (written on last step)
    acc_ref        : (tile_b, 1) f32 VMEM scratch accumulator
    """
    i = pl.program_id(1)  # reduction (batch-tile) step within this partial

    @pl.when(i == 0)
    def _init():
        acc_ref[...] = jnp.zeros_like(acc_ref)

    f1 = f1_ref[...].astype(jnp.float32)
    f2 = f2_ref[...].astype(jnp.float32)
    lbl = label_ref[...].astype(jnp.float32)                    # (tile_b, 1)

    diff = f1 - f2 + EPS                                        # (tile_b, D)
    sq = jnp.sum(diff * diff, axis=-1, keepdims=True)           # (tile_b, 1)
    dist = jnp.sqrt(sq)                                         # (tile_b, 1)
    hinge = jnp.maximum(margin - dist, 0.0)                     # clamp(min=0)
    # label * distance^2 + (1 - label) * hinge^2  (distance^2 == sq exactly)
    per_row = lbl * sq + (1.0 - lbl) * (hinge * hinge)          # (tile_b, 1)

    if needs_mask:
        tb = f1_ref.shape[0]
        tile_idx = pl.program_id(0) * tiles_per_partial + i
        row0 = tile_idx * tb
        rows = row0 + jax.lax.broadcasted_iota(jnp.int32, (tb, 1), 0)
        per_row = jnp.where(rows < total_rows, per_row, 0.0)

    acc_ref[...] += per_row

    @pl.when(i == tiles_per_partial - 1)
    def _finalize():
        total = jnp.sum(acc_ref[...])                           # one XLU reduce
        o_ref[...] = jnp.broadcast_to(total.astype(jnp.float32), o_ref.shape)


def _choose_tile_b(B, D):
    """Largest batch tile that keeps the pipeline comfortably inside VMEM.

    Target ~2 MiB per (tile_b, D) f32 input tile: big enough to sit at the HBM
    roofline, small enough that 2 inputs x 2 pipeline buffers (+ lane-padded
    label / scratch) stay under every generation's default scoped-VMEM limit
    (v5e 16 MiB, v6e/v7x 32 MiB).
    """
    target_bytes = 2 * 1024 * 1024
    tb = max(8, (target_bytes // (4 * D)) // 8 * 8)
    tb = min(tb, 2048)                       # cap lane-padded label/acc waste
    b_padded = ((B + 7) // 8) * 8
    return max(8, min(tb, b_padded))


def contrastive_loss(f1, f2, label, *, margin=1.0, tile_b=None,
                     num_partials=None):
    """Pallas TPU implementation of ContrastiveLoss.forward."""
    assert f1.shape == f2.shape and f1.ndim == 2
    B, D = f1.shape
    assert label.shape == (B,)

    if tile_b is None:
        tile_b = _choose_tile_b(B, D)
    tile_b = max(8, (int(tile_b) // 8) * 8)  # sublane-aligned

    n_tiles = pl.cdiv(B, tile_b)
    if num_partials is None:
        # Split batch tiles across the 2 TensorCores on v7x; size-1 otherwise.
        num_partials = 2 if n_tiles >= 2 else 1
    num_partials = max(1, int(num_partials))

    tiles_per_partial = pl.cdiv(n_tiles, num_partials)
    B_pad = num_partials * tiles_per_partial * tile_b
    needs_mask = (B_pad != B)

    label2d = label.reshape(B, 1).astype(jnp.float32)
    if needs_mask:
        pad = B_pad - B
        f1 = jnp.pad(f1, ((0, pad), (0, 0)))
        f2 = jnp.pad(f2, ((0, pad), (0, 0)))
        label2d = jnp.pad(label2d, ((0, pad), (0, 0)))

    kernel = functools.partial(
        _contrastive_loss_kernel,
        margin=float(margin),
        total_rows=B,
        tiles_per_partial=tiles_per_partial,
        needs_mask=needs_mask,
    )

    feat_map = lambda c, i: (c * tiles_per_partial + i, 0)

    out = pl.pallas_call(
        kernel,
        out_shape=jax.ShapeDtypeStruct((num_partials * 8, 128), jnp.float32),
        grid_spec=pltpu.PrefetchScalarGridSpec(
            num_scalar_prefetch=0,
            grid=(num_partials, tiles_per_partial),
            in_specs=[
                pl.BlockSpec((tile_b, D), feat_map),
                pl.BlockSpec((tile_b, D), feat_map),
                pl.BlockSpec((tile_b, 1), feat_map),
            ],
            out_specs=pl.BlockSpec((8, 128), lambda c, i: (c, 0)),
            scratch_shapes=[pltpu.VMEM((tile_b, 1), jnp.float32)],
        ),
        compiler_params=pltpu.CompilerParams(
            dimension_semantics=("parallel", "arbitrary")),
    )(f1, f2, label2d)

    partials = out.reshape(num_partials, 8, 128)[:, 0, 0]      # per-TC sums
    return jnp.sum(partials) / jnp.float32(B)


def _reference_loss(f1, f2, label, margin=1.0):
    """Pure-JAX reference matching the PyTorch module."""
    diff = f1.astype(jnp.float32) - f2.astype(jnp.float32) + EPS
    dist = jnp.sqrt(jnp.sum(diff * diff, axis=-1))
    hinge = jnp.maximum(margin - dist, 0.0)
    return jnp.mean(label * dist ** 2 + (1.0 - label) * hinge ** 2)


if __name__ == "__main__":
    key = jax.random.PRNGKey(0)
    k1, k2, k3, k4, k5, k6 = jax.random.split(key, 6)

    # Case 1: small pairwise-feature shapes (single tile, single partial).
    B, D = 8, 32
    f1 = jax.random.normal(k1, (B, D), dtype=jnp.float32)
    f2 = jax.random.normal(k2, (B, D), dtype=jnp.float32)
    label = jax.random.bernoulli(k3, 0.5, (B,)).astype(jnp.float32)

    loss = jax.block_until_ready(contrastive_loss(f1, f2, label, margin=1.0))
    ref = _reference_loss(f1, f2, label, margin=1.0)
    assert jnp.allclose(loss, ref, rtol=1e-5, atol=1e-5), (loss, ref)

    # Case 2: ragged batch exercising tiling, padding mask, and the 2-way
    # "parallel" partial split (v7x megacore path; serialized on v5e/v6e).
    B2, D2 = 300, 64
    g1 = jax.random.normal(k4, (B2, D2), dtype=jnp.float32)
    g2 = jax.random.normal(k5, (B2, D2), dtype=jnp.float32)
    lab2 = jax.random.bernoulli(k6, 0.5, (B2,)).astype(jnp.float32)

    loss2 = jax.block_until_ready(
        contrastive_loss(g1, g2, lab2, margin=1.0, tile_b=64, num_partials=2))
    ref2 = _reference_loss(g1, g2, lab2, margin=1.0)
    assert jnp.allclose(loss2, ref2, rtol=1e-5, atol=1e-5), (loss2, ref2)

    print("KERNEL_OK")
</pallas_src>

<mosaic_0001>
module attributes {stable_mosaic.version = 11 : i64} {
  func.func @_contrastive_loss_kernel(%arg0: i32, %arg1: i32, %arg2: memref<8x32xf32, #tpu.memory_space<vmem>>, %arg3: memref<8x32xf32, #tpu.memory_space<vmem>>, %arg4: memref<8x1xf32, #tpu.memory_space<vmem>>, %arg5: memref<8x128xf32, #tpu.memory_space<vmem>>, %arg6: memref<8x1xf32, #tpu.memory_space<vmem>>) attributes {dimension_semantics = [#tpu.dimension_semantics<parallel>, #tpu.dimension_semantics<arbitrary>], iteration_bounds = array<i64: 1, 1>, scalar_prefetch = 0 : i64, scratch_operands = 1 : i64, tpu.core_type = #tpu.core_type<tc>, window_params = [{transform_indices = @transform_0, window_bounds = array<i64: 8, 32>}, {transform_indices = @transform_1, window_bounds = array<i64: 8, 32>}, {transform_indices = @transform_2, window_bounds = array<i64: 8, 1>}, {transform_indices = @transform_3, window_bounds = array<i64: 8, 128>}]} {
    %c0_i32 = arith.constant 0 : i32
    %0 = arith.cmpi eq, %arg1, %c0_i32 : i32
    %1 = arith.extui %0 : i1 to i32
    %c0_i32_0 = arith.constant 0 : i32
    %2 = arith.cmpi ne, %1, %c0_i32_0 : i32
    scf.if %2 {
      %cst_16 = arith.constant 0.000000e+00 : f32
      %29 = vector.broadcast %cst_16 : f32 to vector<8x1xf32>
      %c0_17 = arith.constant 0 : index
      %c0_18 = arith.constant 0 : index
      %30 = vector.load %arg6[%c0_17, %c0_18] : memref<8x1xf32, #tpu.memory_space<vmem>>, vector<8x1xf32>
      tpu.vector_store %arg6[%c0_17, %c0_18], %29 {strides = array<i32>} : memref<8x1xf32, #tpu.memory_space<vmem>>, vector<8x1xf32>,
    } else {
    }
    %c0 = arith.constant 0 : index
    %c0_1 = arith.constant 0 : index
    %3 = vector.load %arg2[%c0, %c0_1] : memref<8x32xf32, #tpu.memory_space<vmem>>, vector<8x32xf32>
    %c0_2 = arith.constant 0 : index
    %c0_3 = arith.constant 0 : index
    %4 = vector.load %arg3[%c0_2, %c0_3] : memref<8x32xf32, #tpu.memory_space<vmem>>, vector<8x32xf32>
    %c0_4 = arith.constant 0 : index
    %c0_5 = arith.constant 0 : index
    %5 = vector.load %arg4[%c0_4, %c0_5] : memref<8x1xf32, #tpu.memory_space<vmem>>, vector<8x1xf32>
    %6 = arith.subf %3, %4 : vector<8x32xf32>
    %cst = arith.constant 9.99999997E-7 : f32
    %7 = vector.broadcast %cst : f32 to vector<8x32xf32>
    %8 = arith.addf %6, %7 : vector<8x32xf32>
    %9 = arith.mulf %8, %8 : vector<8x32xf32>
    %cst_6 = arith.constant dense<0.000000e+00> : vector<8xf32>
    %10 = vector.multi_reduction <add>, %9, %cst_6 [1] : vector<8x32xf32> to vector<8xf32>
    %11 = vector.shape_cast %10 : vector<8xf32> to vector<8x1xf32>
    %12 = math.sqrt %11 : vector<8x1xf32>
    %cst_7 = arith.constant 1.000000e+00 : f32
    %13 = vector.broadcast %cst_7 : f32 to vector<8x1xf32>
    %14 = arith.subf %13, %12 : vector<8x1xf32>
    %cst_8 = arith.constant 0.000000e+00 : f32
    %15 = vector.broadcast %cst_8 : f32 to vector<8x1xf32>
    %16 = arith.maximumf %14, %15 : vector<8x1xf32>
    %17 = arith.mulf %5, %11 : vector<8x1xf32>
    %cst_9 = arith.constant 1.000000e+00 : f32
    %18 = vector.broadcast %cst_9 : f32 to vector<8x1xf32>
    %19 = arith.subf %18, %5 : vector<8x1xf32>
    %20 = arith.mulf %16, %16 : vector<8x1xf32>
    %21 = arith.mulf %19, %20 : vector<8x1xf32>
    %22 = arith.addf %17, %21 : vector<8x1xf32>
    %c0_10 = arith.constant 0 : index
    %c0_11 = arith.constant 0 : index
    %23 = vector.load %arg6[%c0_10, %c0_11] : memref<8x1xf32, #tpu.memory_space<vmem>>, vector<8x1xf32>
    %24 = arith.addf %23, %22 : vector<8x1xf32>
    %c0_12 = arith.constant 0 : index
    %c0_13 = arith.constant 0 : index
    %25 = vector.load %arg6[%c0_12, %c0_13] : memref<8x1xf32, #tpu.memory_space<vmem>>, vector<8x1xf32>
    tpu.vector_store %arg6[%c0_12, %c0_13], %24 {strides = array<i32>} : memref<8x1xf32, #tpu.memory_space<vmem>>, vector<8x1xf32>,
    %c0_i32_14 = arith.constant 0 : i32
    %26 = arith.cmpi eq, %arg1, %c0_i32_14 : i32
    %27 = arith.extui %26 : i1 to i32
    %c0_i32_15 = arith.constant 0 : i32
    %28 = arith.cmpi ne, %27, %c0_i32_15 : i32
    scf.if %28 {
      %c0_16 = arith.constant 0 : index
      %c0_17 = arith.constant 0 : index
      %29 = vector.load %arg6[%c0_16, %c0_17] : memref<8x1xf32, #tpu.memory_space<vmem>>, vector<8x1xf32>
      %30 = vector.shape_cast %29 : vector<8x1xf32> to vector<1x8x1xf32>
      %cst_18 = arith.constant dense<0.000000e+00> : vector<1xf32>
      %31 = vector.multi_reduction <add>, %30, %cst_18 [1, 2] : vector<1x8x1xf32> to vector<1xf32>
      %32 = vector.shape_cast %31 : vector<1xf32> to vector<1x1x1xf32>
      %33 = vector.extract %32[0, 0, 0] : f32 from vector<1x1x1xf32>
      %34 = vector.broadcast %33 : f32 to vector<8x128xf32>
      %c0_19 = arith.constant 0 : index
      %c0_20 = arith.constant 0 : index
      %35 = vector.load %arg5[%c0_19, %c0_20] : memref<8x128xf32, #tpu.memory_space<vmem>>, vector<8x128xf32>
      tpu.vector_store %arg5[%c0_19, %c0_20], %34 {strides = array<i32>} : memref<8x128xf32, #tpu.memory_space<vmem>>, vector<8x128xf32>,
    } else {
    }
    return
  }
  func.func @transform_0(%arg0: i32, %arg1: i32) -> (i32, i32) {
    %c1_i32 = arith.constant 1 : i32
    %0 = arith.muli %arg0, %c1_i32 : i32
    %1 = arith.addi %0, %arg1 : i32
    %c0_i32 = arith.constant 0 : i32
    %c0_i32_0 = arith.constant 0 : i32
    return %1, %c0_i32 : i32, i32
  }
  func.func @transform_1(%arg0: i32, %arg1: i32) -> (i32, i32) {
    %c1_i32 = arith.constant 1 : i32
    %0 = arith.muli %arg0, %c1_i32 : i32
    %1 = arith.addi %0, %arg1 : i32
    %c0_i32 = arith.constant 0 : i32
    %c0_i32_0 = arith.constant 0 : i32
    return %1, %c0_i32 : i32, i32
  }
  func.func @transform_2(%arg0: i32, %arg1: i32) -> (i32, i32) {
    %c1_i32 = arith.constant 1 : i32
    %0 = arith.muli %arg0, %c1_i32 : i32
    %1 = arith.addi %0, %arg1 : i32
    %c0_i32 = arith.constant 0 : i32
    %c0_i32_0 = arith.constant 0 : i32
    return %1, %c0_i32 : i32, i32
  }
  func.func @transform_3(%arg0: i32, %arg1: i32) -> (i32, i32) {
    %c0_i32 = arith.constant 0 : i32
    %c0_i32_0 = arith.constant 0 : i32
    return %arg0, %c0_i32 : i32, i32
  }
}

</mosaic_0001>

<llo_original>
// kernel: tpu_custom_call.1
$region0: #{tpu_custom_call.1}
  #allocation0 [shape = 'u32[]', space=smem, size = 0x4, offset = 0x4, fixed_abs, tag = 'smem constant byte address 0x4 - core index']
  #allocation1 [shape = 'u32[144,128]{1,0:T(1,128)}', space=vmem, size = 0x12000, scoped, tag = 'internal scratch']
  #allocation2 [shape = 'f32[8,1]{1,0:T(8,128)}', space=vmem, size = 0x1000, scoped, tag = 'scratch operand']
  %s0 = inlined_call_operand.vmem [shape: f32[8,32], index: 0, kind: input, shape index: {}]
  %s1 = inlined_call_operand.hbm [shape: f32[8,32], index: 1, kind: input, shape index: {}]
  %s2 = inlined_call_operand.vmem [shape: f32[8,1], index: 2, kind: input, shape index: {}]
  %s3 = inlined_call_operand.hbm [shape: f32[8,128], index: 3, kind: output, shape index: {}]
  %s4 = sld [smem:[#allocation0]]
  $region34: #{tpu_custom_call.1} parent=0
    _
  %s6 = ssub.s32 1, %s4
  %s7 = scalar_select 0, %s6, %s4
  $region1: #{tpu_custom_call.1} parent=0
    #allocation3 [shape = 'u8[4096]{0}', space=vmem, size = 0x1000, scoped, tag = 'input window, operand 1, single buffered']
    #allocation4 [shape = 's32[1]{0}', space=sflag, size = 0x4, scoped, tag = 'scoped memory for tpu_custom_call.1']
    #allocation5 [shape = 's32[1]{0}', space=sflag, size = 0x4, scoped, tag = 'scoped memory for tpu_custom_call.1']
    #allocation6 [shape = 'u8[4096]{0}', space=vmem, size = 0x1000, scoped, tag = 'output window, operand 0, single buffered']
    %8 = vsyncpa [#allocation4], 0
    %9 = vsyncpa [#allocation5], 0
    // Predicated region
    $region2: #{tpu_custom_call.1} parent=1 // pred_check
      _
    $region3: #{tpu_custom_call.1} parent=1 // pred_check_branch
      %11 = sbr.rel (0) target = $region5
    $region4: #{tpu_custom_call.1} parent=1 // pred_region
      %s12 = sadd.s32 0, 0
      %p13 = scmp.lt.s32.totalorder %s12, 0
      %s14 = scalar_select %p13, %s12, 0
      %s15 = smul.addr %s14, 8
      %s16 = scalar_lea.vmem %s0, %s15
      %s17 = sadd.s32 0, 0
    $region5: #{tpu_custom_call.1} parent=1 // pred_fallthru
      _
    // Predicated region
    $region6: #{tpu_custom_call.1} parent=1 // pred_check
      _
    $region7: #{tpu_custom_call.1} parent=1 // pred_check_branch
      %19 = sbr.rel (0) target = $region9
    $region8: #{tpu_custom_call.1} parent=1 // pred_region
      %s20 = sadd.s32 0, 0
      %s22 = ssub.s32 128, 128
      %23 = vsyncadd [#allocation4], %s22
      %s24 = smul.addr %s20, 128
      %s25 = scalar_lea.hbm %s1, %s24
      %s27 = sshll.u32 [#allocation3], 4
      %s28 = int_to_ptr.vmem [resolvable:$true] %s27
      %30 = dma.hbm_to_vmem [thread:$0]  %s25, 128, %s28, [#allocation4]
    $region9: #{tpu_custom_call.1} parent=1 // pred_fallthru
      _
    // Predicated region
    $region10: #{tpu_custom_call.1} parent=1 // pred_check
      _
    $region11: #{tpu_custom_call.1} parent=1 // pred_check_branch
      %32 = sbr.rel (0) target = $region13
    $region12: #{tpu_custom_call.1} parent=1 // pred_region
      %s33 = sadd.s32 0, 0
      %p34 = scmp.lt.s32.totalorder %s33, 0
      %s35 = scalar_select %p34, %s33, 0
      %s36 = smul.addr %s35, 8
      %s37 = scalar_lea.vmem %s2, %s36
      %s38 = sadd.s32 0, 0
    $region13: #{tpu_custom_call.1} parent=1 // pred_fallthru
      _
    // Predicated region
    $region14: #{tpu_custom_call.1} parent=1 // pred_check
      _
    $region15: #{tpu_custom_call.1} parent=1 // pred_check_branch
      %40 = sbr.rel (0) target = $region17
    $region16: #{tpu_custom_call.1} parent=1 // pred_region
      %41 = dma.done [#allocation4], 128
    $region17: #{tpu_custom_call.1} parent=1 // pred_fallthru
      _
    %s42 = sadd.s32 0, 0
    %p43 = scmp.lt.s32.totalorder %s42, 0
    %s44 = scalar_select %p43, %s42, 0
    %s45 = smul.addr %s44, 8
    %s46 = scalar_lea.vmem %s0, %s45
    %s47 = sadd.s32 0, 0
    %p48 = scmp.lt.s32.totalorder %s47, 0
    %s49 = scalar_select %p48, %s47, 0
    %s50 = smul.addr %s49, 8
    %s51 = scalar_lea.vmem %s2, %s50
    %s52 = sadd.s32 0, 0
    %p53 = scmp.lt.s32.totalorder %s52, 0
    %s54 = scalar_select %p53, %s52, 0
    %s55 = smul.addr %s54, 8
    %s56 = scalar_lea.vmem %s0, %s55
    %s57 = sadd.s32 0, 0
    %s58 = sadd.s32 0, 0
    %s59 = sadd.s32 0, 0
    %p60 = scmp.lt.s32.totalorder %s59, 0
    %s61 = scalar_select %p60, %s59, 0
    %s62 = smul.addr %s61, 8
    %s63 = scalar_lea.vmem %s2, %s62
    %s64 = sadd.s32 0, 0
    %p65 = scmp.eq.s32.totalorder 0, 0
    // Predicated region
    $region18: #{tpu_custom_call.1} parent=1 // pred_check
      %p66 = pneg %p65
    $region19: #{tpu_custom_call.1} parent=1 // pred_check_branch
      %68 = sbr.rel (%p66) target = $region21
    $region20: #{tpu_custom_call.1} parent=1 // pred_region
      %vm69 = vcmask 7168
      %70 = vst.msk [vmem:[#allocation2] sm:$0xff] %vm69, 0.0
    $region21: #{tpu_custom_call.1} parent=1 // pred_fallthru
      _
    %v71 = vld [vmem:[%s56] sm:$0xff]
    %v72 = vld [vmem:[#allocation3] sm:$0xff]
    %v73 = vld [vmem:[%s63] sm:$0xff]
    %v74 = vsub.f32 %v71, %v72
    %v75 = vadd.f32 %v74, 1e-06
    %v76 = vmul.f32 %v75, %v75
    %vm77 = vcmask 261120
    %v78 = vsel %vm77, %v76, 0.0
    %79 = vadd.xlane.f32.xlu0 %v78
    %v80 = vpop.xlane.xlu0 %79
    %v81 = vrsqrt.pop %v80
    %v82 = vmul.f32 %v80, %v81
    %vm83 = vcmp.eq.f32.partialorder %v80, inf
    %v84 = vsel %vm83, %v80, %v82
    %vm85 = vcmp.eq.f32.partialorder %v80, 0.0
    %v86 = vand.u32 %v80, 2147483648
    %v87 = vsel %vm85, %v86, %v84
    %v88 = vsub.f32 1.0, %v87
    %v89 = vmax.f32 %v88, 0.0
    %v90 = vmul.f32 %v73, %v80
    %v91 = vsub.f32 1.0, %v73
    %v92 = vmul.f32 %v89, %v89
    %v93 = vmul.f32 %v91, %v92
    %v94 = vadd.f32 %v90, %v93
    %v95 = vld [vmem:[#allocation2] sm:$0xff]
    %v96 = vadd.f32 %v95, %v94
    %vm97 = vcmask 7168
    %98 = vst.msk [vmem:[#allocation2] sm:$0xff] %vm97, %v96
    // Predicated region
    $region22: #{tpu_custom_call.1} parent=1 // pred_check
      %p99 = pneg %p65
    $region23: #{tpu_custom_call.1} parent=1 // pred_check_branch
      %101 = sbr.rel (%p99) target = $region25
    $region24: #{tpu_custom_call.1} parent=1 // pred_region
      %v102 = vld [vmem:[#allocation2] sm:$0xff]
      %v103 = vsel %vm97, %v102, 0.0
      %104 = vadd.xlane.f32.xlu0 %v103
      %v105 = vpop.xlane.xlu0 %104
      %v106 = vrot.slane %v105, 4
      %v107 = vadd.f32 %v105, %v106
      %v108 = vrot.slane %v107, 2
      %v109 = vadd.f32 %v107, %v108
      %v110 = vrot.slane %v109, 1
      %v111 = vadd.f32 %v109, %v110
      %s112 = vtos %v111
      %v113 = vstv %s112
      %114 = vst [vmem:[#allocation6] sm:$0xff] %v113
    $region25: #{tpu_custom_call.1} parent=1 // pred_fallthru
      _
    // Predicated region
    $region26: #{tpu_custom_call.1} parent=1 // pred_check
      _
    $region27: #{tpu_custom_call.1} parent=1 // pred_check_branch
      %116 = sbr.rel (0) target = $region29
    $region28: #{tpu_custom_call.1} parent=1 // pred_region
      %s118 = ssub.s32 128, 128
      %119 = vsyncadd [#allocation5], %s118
      %s121 = sshll.u32 [#allocation6], 4
      %s122 = int_to_ptr.vmem [resolvable:$true] %s121
      %124 = dma.vmem_to_hbm [thread:$0]  %s122, 128, %s3, [#allocation5]
    $region29: #{tpu_custom_call.1} parent=1 // pred_fallthru
      _
    // Predicated region
    $region30: #{tpu_custom_call.1} parent=1 // pred_check
      _
    $region31: #{tpu_custom_call.1} parent=1 // pred_check_branch
      %126 = sbr.rel (0) target = $region33
    $region32: #{tpu_custom_call.1} parent=1 // pred_region
      %127 = dma.done [#allocation5], 128
    $region33: #{tpu_custom_call.1} parent=1 // pred_fallthru
      _
    %128 = vsyncpa [#allocation4], 1
    %129 = vsyncpa [#allocation5], 1

</llo_original>
